<compile_context>
chip_gen: v6e
topology: v6e:2x2x1
jax: 0.10.0
libtpu: 0.0.40
codegen_flags: <defaults>
</compile_context>

<pallas_src>
import functools

import jax
import jax.numpy as jnp
from jax.experimental import pallas as pl
from jax.experimental.pallas import tpu as pltpu


def _round_up(a, m):
    return (a + m - 1) // m * m


# ---------------------------------------------------------------------------
# Pallas kernel: out = maybe_relu(A_hat @ panel + bias), block-sparse over A_hat
# ---------------------------------------------------------------------------
def _spmm_bias_act_kernel(bc_ref, cnt_ref, adj_ref, p_ref, b_ref, o_ref, acc_ref,
                          *, apply_relu, tk, max_blocks):
    i = pl.program_id(0)
    k = pl.program_id(1)

    @pl.when(k == 0)
    def _():
        acc_ref[...] = jnp.zeros_like(acc_ref)

    # Only the first cnt[i] slots hold real (nonzero) adjacency blocks; padded slots
    # repeat the previous block index (no new DMA) and are skipped here.
    @pl.when(k < cnt_ref[i])
    def _():
        col = bc_ref[i * max_blocks + k]
        start = pl.multiple_of(col * tk, tk)
        # bf16 x bf16 -> f32 accumulation on the MXU; panel is resident in VMEM and
        # sliced at the current column block.
        acc_ref[...] += jnp.dot(adj_ref[...], p_ref[pl.ds(start, tk), :],
                                preferred_element_type=jnp.float32)

    @pl.when(k == pl.num_programs(1) - 1)
    def _():
        res = acc_ref[...] + b_ref[...]
        if apply_relu:
            res = jnp.maximum(res, 0.0)
        o_ref[...] = res.astype(o_ref.dtype)


def _spmm_bias_act(adj_bf16, panel_bf16, bias_f32, block_cols, block_counts,
                   *, apply_relu, out_dtype, tm, tk, max_blocks):
    """out[n_pad, c_pad] = maybe_relu(adj @ panel + bias), block-sparse adjacency."""
    n_pad = adj_bf16.shape[0]
    c_pad = panel_bf16.shape[1]
    n_row_tiles = n_pad // tm

    kernel = functools.partial(_spmm_bias_act_kernel, apply_relu=apply_relu,
                               tk=tk, max_blocks=max_blocks)

    # Data-dependent column-block index for the adjacency stream (scalar prefetch).
    adj_map = lambda i, k, bc, cnt: (i, bc[i * max_blocks + k])

    return pl.pallas_call(
        kernel,
        out_shape=jax.ShapeDtypeStruct((n_pad, c_pad), out_dtype),
        grid_spec=pltpu.PrefetchScalarGridSpec(
            num_scalar_prefetch=2,
            grid=(n_row_tiles, max_blocks),
            in_specs=[
                # Dominant HBM stream: only the nonzero adjacency blocks are fetched.
                pl.BlockSpec((tm, tk), adj_map),
                # Whole panel resident in VMEM, fetched once (constant index_map).
                pl.BlockSpec((n_pad, c_pad), lambda i, k, bc, cnt: (0, 0)),
                # Bias: tiny, constant across the grid.
                pl.BlockSpec((1, c_pad), lambda i, k, bc, cnt: (0, 0)),
            ],
            out_specs=pl.BlockSpec((tm, c_pad), lambda i, k, bc, cnt: (i, 0)),
            scratch_shapes=[pltpu.VMEM((tm, c_pad), jnp.float32)],
        ),
        compiler_params=pltpu.CompilerParams(
            dimension_semantics=("parallel", "arbitrary"),
            vmem_limit_bytes=48 * 1024 * 1024,
        ),
    )(block_cols, block_counts, adj_bf16, panel_bf16, bias_f32)


# ---------------------------------------------------------------------------
# Graph preprocessing (plain JAX glue) — matches PyG gcn_norm semantics.
# ---------------------------------------------------------------------------
def build_normalized_adjacency(edge_index, num_nodes):
    """Dense A_hat = D^-1/2 (A + I) D^-1/2."""
    src = edge_index[0]
    dst = edge_index[1]
    adj = jnp.zeros((num_nodes, num_nodes), jnp.float32)
    # scatter-ADD so duplicate edges accumulate (matches PyG's scatter-based norm).
    adj = adj.at[dst, src].add(1.0)
    # add_remaining_self_loops: drop explicit self-loops, set diagonal to exactly 1.
    eye = jnp.eye(num_nodes, dtype=jnp.float32)
    adj = adj * (1.0 - eye) + eye
    deg = adj.sum(axis=1)
    d_inv_sqrt = jnp.where(deg > 0, jax.lax.rsqrt(deg), 0.0)
    return d_inv_sqrt[:, None] * adj * d_inv_sqrt[None, :]


def _build_block_structure(edge_index, num_nodes, n_pad, tm, tk):
    """Block-CSR view of A_hat's (tm, tk) tiling: per row-tile, the sorted list of
    column-block indices containing any nonzero (edges + self-loops), padded by
    repeating the last valid block, plus per-row-tile counts.  O(E + N), host-side;
    requires a concrete edge_index (the grid extent depends on it)."""
    n_row_tiles = n_pad // tm
    n_col_tiles = n_pad // tk
    src = edge_index[0].astype(jnp.int32)
    dst = edge_index[1].astype(jnp.int32)
    diag = jnp.arange(num_nodes, dtype=jnp.int32)

    mask = jnp.zeros((n_row_tiles, n_col_tiles), dtype=bool)
    mask = mask.at[dst // tm, src // tk].set(True)     # A[dst, src] entries
    mask = mask.at[diag // tm, diag // tk].set(True)   # self-loops
    counts = mask.sum(axis=1).astype(jnp.int32)

    col_ids = jnp.arange(n_col_tiles, dtype=jnp.int32)
    # Valid column-block ids first (ascending); invalid slots pushed to the end, clamped.
    keyed = jnp.where(mask, col_ids[None, :], n_col_tiles)
    sorted_cols = jnp.minimum(jnp.sort(keyed, axis=1), n_col_tiles - 1)
    slots = jnp.arange(n_col_tiles, dtype=jnp.int32)
    clamp = jnp.minimum(slots[None, :], jnp.maximum(counts[:, None] - 1, 0))
    padded = jnp.take_along_axis(sorted_cols, clamp, axis=1)  # repeat last valid block

    max_blocks = max(int(counts.max()), 1)
    block_cols = padded[:, :max_blocks].reshape(-1).astype(jnp.int32)
    return block_cols, counts, max_blocks


# ---------------------------------------------------------------------------
# Two-layer GCN encoder forward.
# ---------------------------------------------------------------------------
def gcn_encoder(x, edge_index, w1, b1, w2, b2):
    n, c_in = x.shape
    hidden = w1.shape[1]
    c_out = w2.shape[1]

    lane = 128
    n_pad = _round_up(n, 256)
    # Row tile ("parallel" axis): large enough to amortize per-step overhead, but keep
    # >= 4 row tiles where possible so both v7x TensorCores get work.
    tm = 512 if (n_pad % 512 == 0 and n_pad // 512 >= 4) else 256
    # Reduction tile over A_hat columns: 512 balances DMA size against block-sparsity
    # granularity (finer blocks skip more zeros on sparse graphs).
    tk = 512 if n_pad % 512 == 0 else 256
    h_pad = _round_up(hidden, lane)
    o_pad = _round_up(c_out, lane)

    # Dense normalized adjacency, padded straight into a bf16 buffer (single pass).
    # TODO(synk): for very large graphs a fully sparse (CSR) A_hat — and caching of
    # adj_bf16 / block structure across calls when edge_index is static — would be needed.
    adj = build_normalized_adjacency(edge_index, n)
    adj_bf16 = (jnp.zeros((n_pad, n_pad), jnp.bfloat16)
                .at[:n, :n].set(adj.astype(jnp.bfloat16)))
    block_cols, block_counts, max_blocks = _build_block_structure(
        edge_index, n, n_pad, tm, tk)

    x_pad = jnp.zeros((n_pad, c_in), jnp.float32).at[:n].set(x.astype(jnp.float32))
    w1_pad = jnp.zeros((c_in, h_pad), jnp.float32).at[:, :hidden].set(w1.astype(jnp.float32))
    b1_pad = jnp.zeros((1, h_pad), jnp.float32).at[0, :hidden].set(b1.astype(jnp.float32))
    w2_pad = jnp.zeros((h_pad, o_pad), jnp.bfloat16).at[:hidden, :c_out].set(
        w2.astype(jnp.bfloat16))
    b2_pad = jnp.zeros((1, o_pad), jnp.float32).at[0, :c_out].set(b2.astype(jnp.float32))

    # Skinny feature GEMMs stay in plain XLA; Pallas handles the O(N^2) A_hat reductions.
    xw1 = (x_pad @ w1_pad).astype(jnp.bfloat16)                       # [n_pad, h_pad]
    h = _spmm_bias_act(adj_bf16, xw1, b1_pad, block_cols, block_counts,
                       apply_relu=True, out_dtype=jnp.bfloat16,
                       tm=tm, tk=tk, max_blocks=max_blocks)           # bf16 [n_pad, h_pad]
    hw2 = jnp.dot(h, w2_pad, preferred_element_type=jnp.float32).astype(jnp.bfloat16)
    out = _spmm_bias_act(adj_bf16, hw2, b2_pad, block_cols, block_counts,
                         apply_relu=False, out_dtype=jnp.float32,
                         tm=tm, tk=tk, max_blocks=max_blocks)         # f32 [n_pad, o_pad]
    return out[:n, :c_out]


def reference_gcn_encoder(x, edge_index, w1, b1, w2, b2):
    """Pure-JAX f32 reference for correctness checking."""
    adj_hat = build_normalized_adjacency(edge_index, x.shape[0])
    h = jnp.maximum(adj_hat @ (x @ w1) + b1, 0.0)
    return adj_hat @ (h @ w2) + b2


if __name__ == "__main__":
    # Small deterministic problem: N=16 nodes, in_channels=16, out_channels=8
    # (so hidden = 2 * out_channels = 16).
    N = 16
    in_channels = 16
    out_channels = 8
    hidden = 2 * out_channels

    key = jax.random.PRNGKey(0)
    kx, kw1, kb1, kw2, kb2 = jax.random.split(key, 5)

    x = jax.random.normal(kx, (N, in_channels), dtype=jnp.float32)

    # Deterministic bidirectional ring graph.
    idx = jnp.arange(N, dtype=jnp.int32)
    src = jnp.concatenate([idx, (idx + 1) % N])
    dst = jnp.concatenate([(idx + 1) % N, idx])
    edge_index = jnp.stack([src, dst], axis=0)          # [2, E], E = 2N

    # Deterministic parameter init (glorot-like scale); not a checkpoint load.
    w1 = jax.random.normal(kw1, (in_channels, hidden), dtype=jnp.float32) * 0.1
    b1 = jax.random.normal(kb1, (hidden,), dtype=jnp.float32) * 0.01
    w2 = jax.random.normal(kw2, (hidden, out_channels), dtype=jnp.float32) * 0.1
    b2 = jax.random.normal(kb2, (out_channels,), dtype=jnp.float32) * 0.01

    out = gcn_encoder(x, edge_index, w1, b1, w2, b2)
    out = jax.block_until_ready(out)

    ref = reference_gcn_encoder(x, edge_index, w1, b1, w2, b2)
    assert out.shape == (N, out_channels)
    # bf16 adjacency / activation streams -> looser tolerance than pure f32.
    assert jnp.allclose(out, ref, atol=2e-2, rtol=2e-2), (
        float(jnp.max(jnp.abs(out - ref))))

    print("KERNEL_OK")
</pallas_src>

<mosaic_0001>
module attributes {stable_mosaic.version = 11 : i64} {
  func.func @_spmm_bias_act_kernel(%arg0: i32, %arg1: i32, %arg2: memref<1xi32, #tpu.memory_space<smem>>, %arg3: memref<1xi32, #tpu.memory_space<smem>>, %arg4: memref<256x256xbf16, #tpu.memory_space<vmem>>, %arg5: memref<256x128xbf16, #tpu.memory_space<vmem>>, %arg6: memref<1x128xf32, #tpu.memory_space<vmem>>, %arg7: memref<256x128xbf16, #tpu.memory_space<vmem>>, %arg8: memref<256x128xf32, #tpu.memory_space<vmem>>) attributes {dimension_semantics = [#tpu.dimension_semantics<parallel>, #tpu.dimension_semantics<arbitrary>], iteration_bounds = array<i64: 1, 1>, scalar_prefetch = 2 : i64, scratch_operands = 1 : i64, tpu.core_type = #tpu.core_type<tc>, window_params = [{transform_indices = @transform_0, window_bounds = array<i64: 256, 256>}, {pipeline_mode = #tpu.pipeline_mode<synchronous>, transform_indices = @transform_1, window_bounds = array<i64: 256, 128>}, {pipeline_mode = #tpu.pipeline_mode<synchronous>, transform_indices = @transform_2, window_bounds = array<i64: 1, 128>}, {transform_indices = @transform_3, window_bounds = array<i64: 256, 128>}]} {
    %c0_i32 = arith.constant 0 : i32
    %0 = arith.cmpi eq, %arg1, %c0_i32 : i32
    %1 = arith.extui %0 : i1 to i32
    %c0_i32_0 = arith.constant 0 : i32
    %2 = arith.cmpi ne, %1, %c0_i32_0 : i32
    scf.if %2 {
      %cst = arith.constant 0.000000e+00 : f32
      %11 = vector.broadcast %cst : f32 to vector<256x128xf32>
      %c0 = arith.constant 0 : index
      %c0_4 = arith.constant 0 : index
      %12 = vector.load %arg8[%c0, %c0_4] : memref<256x128xf32, #tpu.memory_space<vmem>>, vector<256x128xf32>
      tpu.vector_store %arg8[%c0, %c0_4], %11 {strides = array<i32>} : memref<256x128xf32, #tpu.memory_space<vmem>>, vector<256x128xf32>,
    } else {
    }
    %3 = arith.index_cast %arg0 : i32 to index
    %4 = memref.load %arg3[%3] : memref<1xi32, #tpu.memory_space<smem>>
    %5 = arith.cmpi slt, %arg1, %4 : i32
    %6 = arith.extui %5 : i1 to i32
    %c0_i32_1 = arith.constant 0 : i32
    %7 = arith.cmpi ne, %6, %c0_i32_1 : i32
    scf.if %7 {
      %c1_i32 = arith.constant 1 : i32
      %11 = arith.muli %arg0, %c1_i32 : i32
      %12 = arith.addi %11, %arg1 : i32
      %13 = arith.index_cast %12 : i32 to index
      %14 = memref.load %arg2[%13] : memref<1xi32, #tpu.memory_space<smem>>
      %c256_i32 = arith.constant 256 : i32
      %15 = arith.muli %14, %c256_i32 : i32
      %16 = tpu.assume_multiple %15, 256 : i32
      %c0 = arith.constant 0 : index
      %c0_4 = arith.constant 0 : index
      %17 = vector.load %arg8[%c0, %c0_4] : memref<256x128xf32, #tpu.memory_space<vmem>>, vector<256x128xf32>
      %c0_5 = arith.constant 0 : index
      %c0_6 = arith.constant 0 : index
      %18 = vector.load %arg4[%c0_5, %c0_6] : memref<256x256xbf16, #tpu.memory_space<vmem>>, vector<256x256xbf16>
      %19 = arith.index_cast %16 : i32 to index
      %c0_7 = arith.constant 0 : index
      %20 = vector.load %arg5[%19, %c0_7] : memref<256x128xbf16, #tpu.memory_space<vmem>>, vector<256x128xbf16>
      %cst = arith.constant dense<0.000000e+00> : vector<256x128xf32>
      %21 = tpu.matmul %18, %20, %cst {dimension_numbers = #tpu.dot_dimension_numbers<[1], [0], [0], [1], [0, 0, 1, 1], [], []>} : vector<256x256xbf16>, vector<256x128xbf16>, vector<256x128xf32> -> vector<256x128xf32>
      %22 = arith.addf %17, %21 : vector<256x128xf32>
      %c0_8 = arith.constant 0 : index
      %c0_9 = arith.constant 0 : index
      %23 = vector.load %arg8[%c0_8, %c0_9] : memref<256x128xf32, #tpu.memory_space<vmem>>, vector<256x128xf32>
      tpu.vector_store %arg8[%c0_8, %c0_9], %22 {strides = array<i32>} : memref<256x128xf32, #tpu.memory_space<vmem>>, vector<256x128xf32>,
    } else {
    }
    %c0_i32_2 = arith.constant 0 : i32
    %8 = arith.cmpi eq, %arg1, %c0_i32_2 : i32
    %9 = arith.extui %8 : i1 to i32
    %c0_i32_3 = arith.constant 0 : i32
    %10 = arith.cmpi ne, %9, %c0_i32_3 : i32
    scf.if %10 {
      %c0 = arith.constant 0 : index
      %c0_4 = arith.constant 0 : index
      %11 = vector.load %arg8[%c0, %c0_4] : memref<256x128xf32, #tpu.memory_space<vmem>>, vector<256x128xf32>
      %c0_5 = arith.constant 0 : index
      %c0_6 = arith.constant 0 : index
      %12 = vector.load %arg6[%c0_5, %c0_6] : memref<1x128xf32, #tpu.memory_space<vmem>>, vector<1x128xf32>
      %13 = vector.broadcast %12 : vector<1x128xf32> to vector<256x128xf32>
      %14 = arith.addf %11, %13 : vector<256x128xf32>
      %cst = arith.constant 0.000000e+00 : f32
      %15 = vector.broadcast %cst : f32 to vector<256x128xf32>
      %16 = arith.maximumf %14, %15 : vector<256x128xf32>
      %17 = arith.truncf %16 : vector<256x128xf32> to vector<256x128xbf16>
      %c0_7 = arith.constant 0 : index
      %c0_8 = arith.constant 0 : index
      %18 = vector.load %arg7[%c0_7, %c0_8] : memref<256x128xbf16, #tpu.memory_space<vmem>>, vector<256x128xbf16>
      tpu.vector_store %arg7[%c0_7, %c0_8], %17 {strides = array<i32>} : memref<256x128xbf16, #tpu.memory_space<vmem>>, vector<256x128xbf16>,
    } else {
    }
    return
  }
  func.func @transform_0(%arg0: i32, %arg1: i32, %arg2: memref<1xi32, #tpu.memory_space<smem>>, %arg3: memref<1xi32, #tpu.memory_space<smem>>) -> (i32, i32) {
    %c1_i32 = arith.constant 1 : i32
    %0 = arith.muli %arg0, %c1_i32 : i32
    %1 = arith.addi %0, %arg1 : i32
    %2 = arith.index_cast %1 : i32 to index
    %3 = memref.load %arg2[%2] : memref<1xi32, #tpu.memory_space<smem>>
    %c0_i32 = arith.constant 0 : i32
    return %arg0, %3 : i32, i32
  }
  func.func @transform_1(%arg0: i32, %arg1: i32, %arg2: memref<1xi32, #tpu.memory_space<smem>>, %arg3: memref<1xi32, #tpu.memory_space<smem>>) -> (i32, i32) {
    %c0_i32 = arith.constant 0 : i32
    %c0_i32_0 = arith.constant 0 : i32
    %c0_i32_1 = arith.constant 0 : i32
    return %c0_i32, %c0_i32_0 : i32, i32
  }
  func.func @transform_2(%arg0: i32, %arg1: i32, %arg2: memref<1xi32, #tpu.memory_space<smem>>, %arg3: memref<1xi32, #tpu.memory_space<smem>>) -> (i32, i32) {
    %c0_i32 = arith.constant 0 : i32
    %c0_i32_0 = arith.constant 0 : i32
    %c0_i32_1 = arith.constant 0 : i32
    return %c0_i32, %c0_i32_0 : i32, i32
  }
  func.func @transform_3(%arg0: i32, %arg1: i32, %arg2: memref<1xi32, #tpu.memory_space<smem>>, %arg3: memref<1xi32, #tpu.memory_space<smem>>) -> (i32, i32) {
    %c0_i32 = arith.constant 0 : i32
    %c0_i32_0 = arith.constant 0 : i32
    return %arg0, %c0_i32 : i32, i32
  }
}

</mosaic_0001>

<llo_original>
// kernel: tpu_custom_call.1
$region0: #{tpu_custom_call.1}
  #allocation0 [shape = 'u32[]', space=smem, size = 0x4, offset = 0x4, fixed_abs, tag = 'smem constant byte address 0x4 - core index']
  #allocation1 [shape = 'u32[144,128]{1,0:T(1,128)}', space=vmem, size = 0x12000, scoped, tag = 'internal scratch']
  #allocation2 [shape = 'f32[256,128]{1,0:T(8,128)}', space=vmem, size = 0x20000, scoped, tag = 'scratch operand']
  #allocation3 [shape = 's32[1]{0}', space=sflag, size = 0x4, scoped, tag = 'scoped memory for tpu_custom_call.1']
  #allocation4 [shape = 's32[1]{0:T(128)S(6)}', space=smem, size = 0x200, scoped, tag = 'prefetched SMEM operand 0']
  #allocation5 [shape = 's32[1]{0:T(128)S(6)}', space=smem, size = 0x200, scoped, tag = 'prefetched SMEM operand 1']
  %s0 = inlined_call_operand.<no memory space> [shape: s32[1], index: 0, kind: input, shape index: {}]
  %s1 = inlined_call_operand.<no memory space> [shape: s32[1], index: 1, kind: input, shape index: {}]
  %s2 = inlined_call_operand.hbm [shape: bf16[256,256], index: 2, kind: input, shape index: {}]
  %s3 = inlined_call_operand.hbm [shape: bf16[256,128], index: 3, kind: input, shape index: {}]
  %s4 = inlined_call_operand.vmem [shape: f32[1,128], index: 4, kind: input, shape index: {}]
  %s5 = inlined_call_operand.hbm [shape: bf16[256,128], index: 5, kind: output, shape index: {}]
  %s6 = sld [smem:[#allocation0]]
  $region42: #{tpu_custom_call.1} parent=0
    _
  %s8 = ssub.s32 1, %s6
  %s9 = scalar_select 0, %s8, %s6
  %10 = sst [smem:[#allocation4]] %s0
  %11 = sst [smem:[#allocation5]] %s1
  $region1: #{tpu_custom_call.1} parent=0
    #allocation6 [shape = 'u8[131072]{0}', space=vmem, size = 0x20000, scoped, tag = 'input window, operand 2, single buffered']
    #allocation7 [shape = 's32[1]{0}', space=sflag, size = 0x4, scoped, tag = 'scoped memory for tpu_custom_call.1']
    #allocation8 [shape = 's32[1]{0}', space=sflag, size = 0x4, scoped, tag = 'scoped memory for tpu_custom_call.1']
    #allocation9 [shape = 'u8[65536]{0}', space=vmem, size = 0x10000, scoped, tag = 'input window, operand 3, single buffered']
    #allocation10 [shape = 's32[1]{0}', space=sflag, size = 0x4, scoped, tag = 'scoped memory for tpu_custom_call.1']
    #allocation11 [shape = 'u8[65536]{0}', space=vmem, size = 0x10000, scoped, tag = 'output window, operand 0, single buffered']
    %12 = vsyncpa [#allocation7], 0
    %13 = vsyncpa [#allocation10], 0
    %14 = vsyncpa [#allocation8], 0
    // Predicated region
    $region2: #{tpu_custom_call.1} parent=1 // pred_check
      _
    $region3: #{tpu_custom_call.1} parent=1 // pred_check_branch
      %16 = sbr.rel (0) target = $region5
    $region4: #{tpu_custom_call.1} parent=1 // pred_region
      %s17 = sadd.s32 0, 0
      %s18 = sld [smem:[#allocation4 + %s17]]
      %s19 = smul.u32 2, %s18
      %s21 = ssub.s32 4096, 4096
      %22 = vsyncadd [#allocation7], %s21
      %s23 = smul.addr %s19, 64
      %s24 = scalar_lea.hbm %s2, %s23
      %s25 = sshll.u32 [#allocation6], 4
      %s26 = int_to_ptr.vmem [resolvable:$true] %s25
      %31 = dma.hbm_to_vmem [thread:$0]  %s24, 4096, %s26, [#allocation7], 128, 128, 8
    $region5: #{tpu_custom_call.1} parent=1 // pred_fallthru
      _
    // Predicated region
    $region6: #{tpu_custom_call.1} parent=1 // pred_check
      _
    $region7: #{tpu_custom_call.1} parent=1 // pred_check_branch
      %33 = sbr.rel (0) target = $region9
    $region8: #{tpu_custom_call.1} parent=1 // pred_region
      %s35 = ssub.s32 2048, 2048
      %36 = vsyncadd [#allocation10], %s35
      %s37 = sshll.u32 [#allocation9], 4
      %s38 = int_to_ptr.vmem [resolvable:$true] %s37
      %43 = dma.hbm_to_vmem [thread:$0]  %s3, 2048, %s38, [#allocation10], 64, 64, 4
    $region9: #{tpu_custom_call.1} parent=1 // pred_fallthru
      _
    // Predicated region
    $region10: #{tpu_custom_call.1} parent=1 // pred_check
      _
    $region11: #{tpu_custom_call.1} parent=1 // pred_check_branch
      %45 = sbr.rel (0) target = $region13
    $region12: #{tpu_custom_call.1} parent=1 // pred_region
      _
    $region13: #{tpu_custom_call.1} parent=1 // pred_fallthru
      _
    // Predicated region
    $region14: #{tpu_custom_call.1} parent=1 // pred_check
      _
    $region15: #{tpu_custom_call.1} parent=1 // pred_check_branch
      %47 = sbr.rel (0) target = $region17
    $region16: #{tpu_custom_call.1} parent=1 // pred_region
      %48 = dma.done [#allocation7], 4096
    $region17: #{tpu_custom_call.1} parent=1 // pred_fallthru
      _
    // Predicated region
    $region18: #{tpu_custom_call.1} parent=1 // pred_check
      _
    $region19: #{tpu_custom_call.1} parent=1 // pred_check_branch
      %50 = sbr.rel (0) target = $region21
    $region20: #{tpu_custom_call.1} parent=1 // pred_region
      %51 = dma.done [#allocation10], 2048
    $region21: #{tpu_custom_call.1} parent=1 // pred_fallthru
      _
    %s52 = sadd.s32 0, 0
    %s53 = sld [smem:[#allocation4 + %s52]]
    %s54 = smul.u32 2, %s53
    %p56 = scmp.eq.s32.totalorder 0, 0
    // Predicated region
    $region22: #{tpu_custom_call.1} parent=1 // pred_check
      %p57 = pneg %p56
    $region23: #{tpu_custom_call.1} parent=1 // pred_check_branch
      %59 = sbr.rel (%p57) target = $region25
    $region24: #{tpu_custom_call.1} parent=1 // pred_region
      %60 = vst [vmem:[#allocation2] sm:$0xff] 0.0
      %61 = vst [vmem:[#allocation2 + $0x8] sm:$0xff] 0.0
      %62 = vst [vmem:[#allocation2 + $0x10] sm:$0xff] 0.0
      %63 = vst [vmem:[#allocation2 + $0x18] sm:$0xff] 0.0
      %64 = vst [vmem:[#allocation2 + $0x20] sm:$0xff] 0.0
      %65 = vst [vmem:[#allocation2 + $0x28] sm:$0xff] 0.0
      %66 = vst [vmem:[#allocation2 + $0x30] sm:$0xff] 0.0
      %67 = vst [vmem:[#allocation2 + $0x38] sm:$0xff] 0.0
      %68 = vst [vmem:[#allocation2 + $0x40] sm:$0xff] 0.0
      %69 = vst [vmem:[#allocation2 + $0x48] sm:$0xff] 0.0
      %70 = vst [vmem:[#allocation2 + $0x50] sm:$0xff] 0.0
      %71 = vst [vmem:[#allocation2 + $0x58] sm:$0xff] 0.0
      %72 = vst [vmem:[#allocation2 + $0x60] sm:$0xff] 0.0
      %73 = vst [vmem:[#allocation2 + $0x68] sm:$0xff] 0.0
      %74 = vst [vmem:[#allocation2 + $0x70] sm:$0xff] 0.0
      %75 = vst [vmem:[#allocation2 + $0x78] sm:$0xff] 0.0
      %76 = vst [vmem:[#allocation2 + $0x80] sm:$0xff] 0.0
      %77 = vst [vmem:[#allocation2 + $0x88] sm:$0xff] 0.0
      %78 = vst [vmem:[#allocation2 + $0x90] sm:$0xff] 0.0
      %79 = vst [vmem:[#allocation2 + $0x98] sm:$0xff] 0.0
      %80 = vst [vmem:[#allocation2 + $0xa0] sm:$0xff] 0.0
      %81 = vst [vmem:[#allocation2 + $0xa8] sm:$0xff] 0.0
      %82 = vst [vmem:[#allocation2 + $0xb0] sm:$0xff] 0.0
      %83 = vst [vmem:[#allocation2 + $0xb8] sm:$0xff] 0.0
      %84 = vst [vmem:[#allocation2 + $0xc0] sm:$0xff] 0.0
      %85 = vst [vmem:[#allocation2 + $0xc8] sm:$0xff] 0.0
      %86 = vst [vmem:[#allocation2 + $0xd0] sm:$0xff] 0.0
      %87 = vst [vmem:[#allocation2 + $0xd8] sm:$0xff] 0.0
      %88 = vst [vmem:[#allocation2 + $0xe0] sm:$0xff] 0.0
      %89 = vst [vmem:[#allocation2 + $0xe8] sm:$0xff] 0.0
      %90 = vst [vmem:[#allocation2 + $0xf0] sm:$0xff] 0.0
      %91 = vst [vmem:[#allocation2 + $0xf8] sm:$0xff] 0.0
    $region25: #{tpu_custom_call.1} parent=1 // pred_fallthru
      _
    %s92 = sld [smem:[#allocation5]]
    %p93 = scmp.lt.s32.totalorder 0, %s92
    // Predicated region
    $region26: #{tpu_custom_call.1} parent=1 // pred_check
      %p94 = pneg %p93
    $region27: #{tpu_custom_call.1} parent=1 // pred_check_branch
      %96 = sbr.rel (%p94) target = $region29
    $region28: #{tpu_custom_call.1} parent=1 // pred_region
      %s97 = sadd.s32 0, 0
      %s98 = sld [smem:[#allocation4 + %s97]]
      %s99 = smul.u32 %s98, 256
      %v100 = vld [vmem:[#allocation2] sm:$0xff]
      %v101 = vld [vmem:[#allocation2 + $0x8] sm:$0xff]
      %v102 = vld [vmem:[#allocation2 + $0x10] sm:$0xff]
      %v103 = vld [vmem:[#allocation2 + $0x18] sm:$0xff]
      %v104 = vld [vmem:[#allocation2 + $0x20] sm:$0xff]
      %v105 = vld [vmem:[#allocation2 + $0x28] sm:$0xff]
      %v106 = vld [vmem:[#allocation2 + $0x30] sm:$0xff]
      %v107 = vld [vmem:[#allocation2 + $0x38] sm:$0xff]
      %v108 = vld [vmem:[#allocation2 + $0x40] sm:$0xff]
      %v109 = vld [vmem:[#allocation2 + $0x48] sm:$0xff]
      %v110 = vld [vmem:[#allocation2 + $0x50] sm:$0xff]
      %v111 = vld [vmem:[#allocation2 + $0x58] sm:$0xff]
      %v112 = vld [vmem:[#allocation2 + $0x60] sm:$0xff]
      %v113 = vld [vmem:[#allocation2 + $0x68] sm:$0xff]
      %v114 = vld [vmem:[#allocation2 + $0x70] sm:$0xff]
      %v115 = vld [vmem:[#allocation2 + $0x78] sm:$0xff]
      %v116 = vld [vmem:[#allocation2 + $0x80] sm:$0xff]
      %v117 = vld [vmem:[#allocation2 + $0x88] sm:$0xff]
      %v118 = vld [vmem:[#allocation2 + $0x90] sm:$0xff]
      %v119 = vld [vmem:[#allocation2 + $0x98] sm:$0xff]
      %v120 = vld [vmem:[#allocation2 + $0xa0] sm:$0xff]
      %v121 = vld [vmem:[#allocation2 + $0xa8] sm:$0xff]
      %v122 = vld [vmem:[#allocation2 + $0xb0] sm:$0xff]
      %v123 = vld [vmem:[#allocation2 + $0xb8] sm:$0xff]
      %v124 = vld [vmem:[#allocation2 + $0xc0] sm:$0xff]
      %v125 = vld [vmem:[#allocation2 + $0xc8] sm:$0xff]
      %v126 = vld [vmem:[#allocation2 + $0xd0] sm:$0xff]
      %v127 = vld [vmem:[#allocation2 + $0xd8] sm:$0xff]
      %v128 = vld [vmem:[#allocation2 + $0xe0] sm:$0xff]
      %v129 = vld [vmem:[#allocation2 + $0xe8] sm:$0xff]
      %v130 = vld [vmem:[#allocation2 + $0xf0] sm:$0xff]
      %v131 = vld [vmem:[#allocation2 + $0xf8] sm:$0xff]
      %v132 = vld [vmem:[#allocation6] sm:$0xff]
      %v133 = vld [vmem:[#allocation6 + $0x8] sm:$0xff]
      %v134 = vld [vmem:[#allocation6 + $0x10] sm:$0xff]
      %v135 = vld [vmem:[#allocation6 + $0x18] sm:$0xff]
      %v136 = vld [vmem:[#allocation6 + $0x20] sm:$0xff]
      %v137 = vld [vmem:[#allocation6 + $0x28] sm:$0xff]
      %v138 = vld [vmem:[#allocation6 + $0x30] sm:$0xff]
      %v139 = vld [vmem:[#allocation6 + $0x38] sm:$0xff]
      %v140 = vld [vmem:[#allocation6 + $0x40] sm:$0xff]
      %v141 = vld [vmem:[#allocation6 + $0x48] sm:$0xff]
      %v142 = vld [vmem:[#allocation6 + $0x50] sm:$0xff]
      %v143 = vld [vmem:[#allocation6 + $0x58] sm:$0xff]
      %v144 = vld [vmem:[#allocation6 + $0x60] sm:$0xff]
      %v145 = vld [vmem:[#allocation6 + $0x68] sm:$0xff]
      %v146 = vld [vmem:[#allocation6 + $0x70] sm:$0xff]
      %v147 = vld [vmem:[#allocation6 + $0x78] sm:$0xff]
      %v148 = vld [vmem:[#allocation6 + $0x80] sm:$0xff]
      %v149 = vld [vmem:[#allocation6 + $0x88] sm:$0xff]
      %v150 = vld [vmem:[#allocation6 + $0x90] sm:$0xff]
      %v151 = vld [vmem:[#allocation6 + $0x98] sm:$0xff]
      %v152 = vld [vmem:[#allocation6 + $0xa0] sm:$0xff]
      %v153 = vld [vmem:[#allocation6 + $0xa8] sm:$0xff]
      %v154 = vld [vmem:[#allocation6 + $0xb0] sm:$0xff]
      %v155 = vld [vmem:[#allocation6 + $0xb8] sm:$0xff]
      %v156 = vld [vmem:[#allocation6 + $0xc0] sm:$0xff]
      %v157 = vld [vmem:[#allocation6 + $0xc8] sm:$0xff]
      %v158 = vld [vmem:[#allocation6 + $0xd0] sm:$0xff]
      %v159 = vld [vmem:[#allocation6 + $0xd8] sm:$0xff]
      %v160 = vld [vmem:[#allocation6 + $0xe0] sm:$0xff]
      %v161 = vld [vmem:[#allocation6 + $0xe8] sm:$0xff]
      %v162 = vld [vmem:[#allocation6 + $0xf0] sm:$0xff]
      %v163 = vld [vmem:[#allocation6 + $0xf8] sm:$0xff]
      %s164 = sshra.s32 %s99, 3
      %s165 = sand.u32 %s99, 7
      %s166 = smul.addr %s164, 4
      %s167 = scalar_lea.vmem [#allocation9], %s166
      %v168 = vld [vmem:[%s167] sm:$0xf]
      %v169 = vld [vmem:[%s167 + $0x4] sm:$0xf]
      %v170 = vld [vmem:[%s167 + $0x8] sm:$0xf]
      %v171 = vld [vmem:[%s167 + $0xc] sm:$0xf]
      %v172 = vld [vmem:[%s167 + $0x10] sm:$0xf]
      %v173 = vld [vmem:[%s167 + $0x14] sm:$0xf]
      %v174 = vld [vmem:[%s167 + $0x18] sm:$0xf]
      %v175 = vld [vmem:[%s167 + $0x1c] sm:$0xf]
      %v176 = vld [vmem:[%s167 + $0x20] sm:$0xf]
      %v177 = vld [vmem:[%s167 + $0x24] sm:$0xf]
      %v178 = vld [vmem:[%s167 + $0x28] sm:$0xf]
      %v179 = vld [vmem:[%s167 + $0x2c] sm:$0xf]
      %v180 = vld [vmem:[%s167 + $0x30] sm:$0xf]
      %v181 = vld [vmem:[%s167 + $0x34] sm:$0xf]
      %v182 = vld [vmem:[%s167 + $0x38] sm:$0xf]
      %v183 = vld [vmem:[%s167 + $0x3c] sm:$0xf]
      %v184 = vld [vmem:[%s167 + $0x40] sm:$0xf]
      %v185 = vld [vmem:[%s167 + $0x44] sm:$0xf]
      %v186 = vld [vmem:[%s167 + $0x48] sm:$0xf]
      %v187 = vld [vmem:[%s167 + $0x4c] sm:$0xf]
      %v188 = vld [vmem:[%s167 + $0x50] sm:$0xf]
      %v189 = vld [vmem:[%s167 + $0x54] sm:$0xf]
      %v190 = vld [vmem:[%s167 + $0x58] sm:$0xf]
      %v191 = vld [vmem:[%s167 + $0x5c] sm:$0xf]
      %v192 = vld [vmem:[%s167 + $0x60] sm:$0xf]
      %v193 = vld [vmem:[%s167 + $0x64] sm:$0xf]
      %v194 = vld [vmem:[%s167 + $0x68] sm:$0xf]
      %v195 = vld [vmem:[%s167 + $0x6c] sm:$0xf]
      %v196 = vld [vmem:[%s167 + $0x70] sm:$0xf]
      %v197 = vld [vmem:[%s167 + $0x74] sm:$0xf]
      %v198 = vld [vmem:[%s167 + $0x78] sm:$0xf]
      %v199 = vld [vmem:[%s167 + $0x7c] sm:$0xf]
      %v232 = vunpack.c.l.b16 %v132
      %v233 = vunpack.c.h.b16 %v132
      %v234 = vunpack.c.l.b16 %v133
      %v235 = vunpack.c.h.b16 %v133
      %v236 = vunpack.c.l.b16 %v134
      %v237 = vunpack.c.h.b16 %v134
      %v238 = vunpack.c.l.b16 %v135
      %v239 = vunpack.c.h.b16 %v135
      %v240 = vunpack.c.l.b16 %v136
      %v241 = vunpack.c.h.b16 %v136
      %v242 = vunpack.c.l.b16 %v137
      %v243 = vunpack.c.h.b16 %v137
      %v244 = vunpack.c.l.b16 %v138
      %v245 = vunpack.c.h.b16 %v138
      %v246 = vunpack.c.l.b16 %v139
      %v247 = vunpack.c.h.b16 %v139
      %v248 = vunpack.c.l.b16 %v140
      %v249 = vunpack.c.h.b16 %v140
      %v250 = vunpack.c.l.b16 %v141
      %v251 = vunpack.c.h.b16 %v141
      %v252 = vunpack.c.l.b16 %v142
      %v253 = vunpack.c.h.b16 %v142
      %v254 = vunpack.c.l.b16 %v143
      %v255 = vunpack.c.h.b16 %v143
      %v256 = vunpack.c.l.b16 %v144
      %v257 = vunpack.c.h.b16 %v144
      %v258 = vunpack.c.l.b16 %v145
      %v259 = vunpack.c.h.b16 %v145
      %v260 = vunpack.c.l.b16 %v146
      %v261 = vunpack.c.h.b16 %v146
      %v262 = vunpack.c.l.b16 %v147
      %v263 = vunpack.c.h.b16 %v147
      %v264 = vunpack.c.l.b16 %v148
      %v265 = vunpack.c.h.b16 %v148
      %v266 = vunpack.c.l.b16 %v149
      %v267 = vunpack.c.h.b16 %v149
      %v268 = vunpack.c.l.b16 %v150
      %v269 = vunpack.c.h.b16 %v150
      %v270 = vunpack.c.l.b16 %v151
      %v271 = vunpack.c.h.b16 %v151
      %v272 = vunpack.c.l.b16 %v152
      %v273 = vunpack.c.h.b16 %v152
      %v274 = vunpack.c.l.b16 %v153
      %v275 = vunpack.c.h.b16 %v153
      %v276 = vunpack.c.l.b16 %v154
      %v277 = vunpack.c.h.b16 %v154
      %v278 = vunpack.c.l.b16 %v155
      %v279 = vunpack.c.h.b16 %v155
      %v280 = vunpack.c.l.b16 %v156
      %v281 = vunpack.c.h.b16 %v156
      %v282 = vunpack.c.l.b16 %v157
      %v283 = vunpack.c.h.b16 %v157
      %v284 = vunpack.c.l.b16 %v158
      %v285 = vunpack.c.h.b16 %v158
      %v286 = vunpack.c.l.b16 %v159
      %v287 = vunpack.c.h.b16 %v159
      %v288 = vunpack.c.l.b16 %v160
      %v289 = vunpack.c.h.b16 %v160
      %v290 = vunpack.c.l.b16 %v161
      %v291 = vunpack.c.h.b16 %v161
      %v292 = vunpack.c.l.b16 %v162
      %v293 = vunpack.c.h.b16 %v162
      %v294 = vunpack.c.l.b16 %v163
      %v295 = vunpack.c.h.b16 %v163
      %v296 = vpack.c.b16 %v234, %v232
      %v297 = vpack.c.b16 %v235, %v233
      %v298 = vpack.c.b16 %v238, %v236
      %v299 = vpack.c.b16 %v239, %v237
      %v300 = vpack.c.b16 %v242, %v240
      %v301 = vpack.c.b16 %v243, %v241
      %v302 = vpack.c.b16 %v246, %v244
      %v303 = vpack.c.b16 %v247, %v245
      %v304 = vpack.c.b16 %v250, %v248
      %v305 = vpack.c.b16 %v251, %v249
      %v306 = vpack.c.b16 %v254, %v252
      %v307 = vpack.c.b16 %v255, %v253
      %v308 = vpack.c.b16 %v258, %v256
      %v309 = vpack.c.b16 %v259, %v257
      %v310 = vpack.c.b16 %v262, %v260
      %v311 = vpack.c.b16 %v263, %v261
      %v312 = vpack.c.b16 %v266, %v264
      %v313 = vpack.c.b16 %v267, %v265
      %v314 = vpack.c.b16 %v270, %v268
      %v315 = vpack.c.b16 %v271, %v269
      %v316 = vpack.c.b16 %v274, %v272
      %v317 = vpack.c.b16 %v275, %v273
      %v318 = vpack.c.b16 %v278, %v276
      %v319 = vpack.c.b16 %v279, %v277
      %v320 = vpack.c.b16 %v282, %v280
      %v321 = vpack.c.b16 %v283, %v281
      %v322 = vpack.c.b16 %v286, %v284
      %v323 = vpack.c.b16 %v287, %v285
      %v324 = vpack.c.b16 %v290, %v288
      %v325 = vpack.c.b16 %v291, %v289
      %v326 = vpack.c.b16 %v294, %v292
      %v327 = vpack.c.b16 %v295, %v293
      %v392 = vunpack.c.l.b16 %v168
      %v393 = vunpack.c.l.b16 %v169
      %v394 = vunpack.c.l.b16 %v170
      %v395 = vunpack.c.l.b16 %v171
      %v396 = vunpack.c.l.b16 %v172
      %v397 = vunpack.c.l.b16 %v173
      %v398 = vunpack.c.l.b16 %v174
      %v399 = vunpack.c.l.b16 %v175
      %v400 = vunpack.c.l.b16 %v176
      %v401 = vunpack.c.l.b16 %v177
      %v402 = vunpack.c.l.b16 %v178
      %v403 = vunpack.c.l.b16 %v179
      %v404 = vunpack.c.l.b16 %v180
      %v405 = vunpack.c.l.b16 %v181
      %v406 = vunpack.c.l.b16 %v182
      %v407 = vunpack.c.l.b16 %v183
      %v408 = vunpack.c.l.b16 %v184
      %v409 = vunpack.c.l.b16 %v185
      %v410 = vunpack.c.l.b16 %v186
      %v411 = vunpack.c.l.b16 %v187
      %v412 = vunpack.c.l.b16 %v188
      %v413 = vunpack.c.l.b16 %v189
      %v414 = vunpack.c.l.b16 %v190
      %v415 = vunpack.c.l.b16 %v191
      %v416 = vunpack.c.l.b16 %v192
      %v417 = vunpack.c.l.b16 %v193
      %v418 = vunpack.c.l.b16 %v194
      %v419 = vunpack.c.l.b16 %v195
      %v420 = vunpack.c.l.b16 %v196
      %v421 = vunpack.c.l.b16 %v197
      %v422 = vunpack.c.l.b16 %v198
      %v423 = vunpack.c.l.b16 %v199
      %v424 = vpack.c.b16 %v393, %v392
      %v425 = vpack.c.b16 %v395, %v394
      %v426 = vpack.c.b16 %v397, %v396
      %v427 = vpack.c.b16 %v399, %v398
      %v428 = vpack.c.b16 %v401, %v400
      %v429 = vpack.c.b16 %v403, %v402
      %v430 = vpack.c.b16 %v405, %v404
      %v431 = vpack.c.b16 %v407, %v406
      %v432 = vpack.c.b16 %v409, %v408
      %v433 = vpack.c.b16 %v411, %v410
      %v434 = vpack.c.b16 %v413, %v412
      %v435 = vpack.c.b16 %v415, %v414
      %v436 = vpack.c.b16 %v417, %v416
      %v437 = vpack.c.b16 %v419, %v418
      %v438 = vpack.c.b16 %v421, %v420
      %v439 = vpack.c.b16 %v423, %v422
      %456 = vmatprep.subr.bf16.mxu0 0
      %457 = vmatpush1.bf16.msra.mxu0 %v431
      %458 = vmatprep.subr.bf16.mxu0 0
      %459 = vmatpush1.bf16.msra.mxu0 %v430
      %460 = vmatprep.subr.bf16.mxu0 0
      %461 = vmatpush1.bf16.msra.mxu0 %v429
      %462 = vmatprep.subr.bf16.mxu0 0
      %463 = vmatpush1.bf16.msra.mxu0 %v428
      %464 = vmatprep.subr.bf16.mxu0 0
      %465 = vmatpush1.bf16.msra.mxu0 %v427
      %466 = vmatprep.subr.bf16.mxu0 0
      %467 = vmatpush1.bf16.msra.mxu0 %v426
      %468 = vmatprep.subr.bf16.mxu0 0
      %469 = vmatpush1.bf16.msra.mxu0 %v425
      %470 = vmatprep.subr.bf16.mxu0 0
      %471 = vmatpush1.bf16.msra.mxu0 %v424
      %472 = vmatprep.subr.bf16.mxu0 0
      %473 = vmatpush2.bf16.msra.mxu0 %v439
      %474 = vmatprep.subr.bf16.mxu0 0
      %475 = vmatpush2.bf16.msra.mxu0 %v438
      %476 = vmatprep.subr.bf16.mxu0 0
      %477 = vmatpush2.bf16.msra.mxu0 %v437
      %478 = vmatprep.subr.bf16.mxu0 0
      %479 = vmatpush2.bf16.msra.mxu0 %v436
      %480 = vmatprep.subr.bf16.mxu0 0
      %481 = vmatpush2.bf16.msra.mxu0 %v435
      %482 = vmatprep.subr.bf16.mxu0 0
      %483 = vmatpush2.bf16.msra.mxu0 %v434
      %484 = vmatprep.subr.bf16.mxu0 0
      %485 = vmatpush2.bf16.msra.mxu0 %v433
      %486 = vmatprep.subr.bf16.mxu0 0
      %487 = vmatpush2.bf16.msra.mxu0 %v432
      %488 = vmatprep.mubr.bf16.mxu0 %v297
      %489 = vmatmul.mubr.bf16.gmra.mxu0 %v296
      %v490 = vpop.f32.mrf.mxu0
      %v491 = vadd.f32 0.0, %v490
      %v492 = vpop.f32.mrf.mxu0
      %v493 = vpop.f32.mrf.mxu0
      %v494 = vadd.f32 0.0, %v493
      %v495 = vpop.f32.mrf.mxu0
      %496 = vmatprep.mubr.bf16.mxu0 %v299
      %497 = vmatmul.mubr.bf16.gmra.mxu0 %v298
      %v498 = vpop.f32.mrf.mxu0
      %v499 = vadd.f32 0.0, %v498
      %v500 = vpop.f32.mrf.mxu0
      %v501 = vpop.f32.mrf.mxu0
      %v502 = vadd.f32 0.0, %v501
      %v503 = vpop.f32.mrf.mxu0
      %504 = vmatprep.mubr.bf16.mxu0 %v301
      %505 = vmatmul.mubr.bf16.gmra.mxu0 %v300
      %v506 = vpop.f32.mrf.mxu0
      %v507 = vadd.f32 0.0, %v506
      %v508 = vpop.f32.mrf.mxu0
      %v509 = vpop.f32.mrf.mxu0
      %v510 = vadd.f32 0.0, %v509
      %v511 = vpop.f32.mrf.mxu0
      %512 = vmatprep.mubr.bf16.mxu0 %v303
      %513 = vmatmul.mubr.bf16.gmra.mxu0 %v302
      %v514 = vpop.f32.mrf.mxu0
      %v515 = vadd.f32 0.0, %v514
      %v516 = vpop.f32.mrf.mxu0
      %v517 = vpop.f32.mrf.mxu0
      %v518 = vadd.f32 0.0, %v517
      %v519 = vpop.f32.mrf.mxu0
      %520 = vmatprep.mubr.bf16.mxu0 %v305
      %521 = vmatmul.mubr.bf16.gmra.mxu0 %v304
      %v522 = vpop.f32.mrf.mxu0
      %v523 = vadd.f32 0.0, %v522
      %v524 = vpop.f32.mrf.mxu0
      %v525 = vpop.f32.mrf.mxu0
      %v526 = vadd.f32 0.0, %v525
      %v527 = vpop.f32.mrf.mxu0
      %528 = vmatprep.mubr.bf16.mxu0 %v307
      %529 = vmatmul.mubr.bf16.gmra.mxu0 %v306
      %v530 = vpop.f32.mrf.mxu0
      %v531 = vadd.f32 0.0, %v530
      %v532 = vpop.f32.mrf.mxu0
      %v533 = vpop.f32.mrf.mxu0
      %v534 = vadd.f32 0.0, %v533
      %v535 = vpop.f32.mrf.mxu0
      %536 = vmatprep.mubr.bf16.mxu0 %v309
      %537 = vmatmul.mubr.bf16.gmra.mxu0 %v308
      %v538 = vpop.f32.mrf.mxu0
      %v539 = vadd.f32 0.0, %v538
      %v540 = vpop.f32.mrf.mxu0
      %v541 = vpop.f32.mrf.mxu0
      %v542 = vadd.f32 0.0, %v541
      %v543 = vpop.f32.mrf.mxu0
      %544 = vmatprep.mubr.bf16.mxu0 %v311
      %545 = vmatmul.mubr.bf16.gmra.mxu0 %v310
      %v546 = vpop.f32.mrf.mxu0
      %v547 = vadd.f32 0.0, %v546
      %v548 = vpop.f32.mrf.mxu0
      %v549 = vpop.f32.mrf.mxu0
      %v550 = vadd.f32 0.0, %v549
      %v551 = vpop.f32.mrf.mxu0
      %552 = vmatprep.mubr.bf16.mxu0 %v313
      %553 = vmatmul.mubr.bf16.gmra.mxu0 %v312
      %v554 = vpop.f32.mrf.mxu0
      %v555 = vadd.f32 0.0, %v554
      %v556 = vpop.f32.mrf.mxu0
      %v557 = vpop.f32.mrf.mxu0
      %v558 = vadd.f32 0.0, %v557
      %v559 = vpop.f32.mrf.mxu0
      %560 = vmatprep.mubr.bf16.mxu0 %v315
      %561 = vmatmul.mubr.bf16.gmra.mxu0 %v314
      %v562 = vpop.f32.mrf.mxu0
      %v563 = vadd.f32 0.0, %v562
      %v564 = vpop.f32.mrf.mxu0
      %v565 = vpop.f32.mrf.mxu0
      %v566 = vadd.f32 0.0, %v565
      %v567 = vpop.f32.mrf.mxu0
      %568 = vmatprep.mubr.bf16.mxu0 %v317
      %569 = vmatmul.mubr.bf16.gmra.mxu0 %v316
      %v570 = vpop.f32.mrf.mxu0
      %v571 = vadd.f32 0.0, %v570
      %v572 = vpop.f32.mrf.mxu0
      %v573 = vpop.f32.mrf.mxu0
      %v574 = vadd.f32 0.0, %v573
      %v575 = vpop.f32.mrf.mxu0
      %576 = vmatprep.mubr.bf16.mxu0 %v319
      %577 = vmatmul.mubr.bf16.gmra.mxu0 %v318
      %v578 = vpop.f32.mrf.mxu0
      %v579 = vadd.f32 0.0, %v578
      %v580 = vpop.f32.mrf.mxu0
      %v581 = vpop.f32.mrf.mxu0
      %v582 = vadd.f32 0.0, %v581
      %v583 = vpop.f32.mrf.mxu0
      %584 = vmatprep.mubr.bf16.mxu0 %v321
      %585 = vmatmul.mubr.bf16.gmra.mxu0 %v320
      %v586 = vpop.f32.mrf.mxu0
      %v587 = vadd.f32 0.0, %v586
      %v588 = vpop.f32.mrf.mxu0
      %v589 = vpop.f32.mrf.mxu0
      %v590 = vadd.f32 0.0, %v589
      %v591 = vpop.f32.mrf.mxu0
      %592 = vmatprep.mubr.bf16.mxu0 %v323
      %593 = vmatmul.mubr.bf16.gmra.mxu0 %v322
      %v594 = vpop.f32.mrf.mxu0
      %v595 = vadd.f32 0.0, %v594
      %v596 = vpop.f32.mrf.mxu0
      %v597 = vpop.f32.mrf.mxu0
      %v598 = vadd.f32 0.0, %v597
      %v599 = vpop.f32.mrf.mxu0
      %600 = vmatprep.mubr.bf16.mxu0 %v325
      %601 = vmatmul.mubr.bf16.gmra.mxu0 %v324
      %v602 = vpop.f32.mrf.mxu0
      %v603 = vadd.f32 0.0, %v602
      %v604 = vpop.f32.mrf.mxu0
      %v605 = vpop.f32.mrf.mxu0
      %v606 = vadd.f32 0.0, %v605
      %v607 = vpop.f32.mrf.mxu0
      %608 = vmatprep.mubr.bf16.mxu0 %v327
      %609 = vmatmul.mubr.bf16.gmra.mxu0 %v326
      %v610 = vpop.f32.mrf.mxu0
      %v611 = vadd.f32 0.0, %v610
      %v612 = vpop.f32.mrf.mxu0
      %v613 = vpop.f32.mrf.mxu0
      %v614 = vadd.f32 0.0, %v613
      %v615 = vpop.f32.mrf.mxu0
      %616 = vdwg.mxu0
      %v617 = vadd.f32 %v100, %v491
      %v618 = vadd.f32 %v101, %v494
      %v619 = vadd.f32 %v102, %v499
      %v620 = vadd.f32 %v103, %v502
      %v621 = vadd.f32 %v104, %v507
      %v622 = vadd.f32 %v105, %v510
      %v623 = vadd.f32 %v106, %v515
      %v624 = vadd.f32 %v107, %v518
      %v625 = vadd.f32 %v108, %v523
      %v626 = vadd.f32 %v109, %v526
      %v627 = vadd.f32 %v110, %v531
      %v628 = vadd.f32 %v111, %v534
      %v629 = vadd.f32 %v112, %v539
      %v630 = vadd.f32 %v113, %v542
      %v631 = vadd.f32 %v114, %v547
      %v632 = vadd.f32 %v115, %v550
      %v633 = vadd.f32 %v116, %v555
      %v634 = vadd.f32 %v117, %v558
      %v635 = vadd.f32 %v118, %v563
      %v636 = vadd.f32 %v119, %v566
      %v637 = vadd.f32 %v120, %v571
      %v638 = vadd.f32 %v121, %v574
      %v639 = vadd.f32 %v122, %v579
      %v640 = vadd.f32 %v123, %v582
      %v641 = vadd.f32 %v124, %v587
      %v642 = vadd.f32 %v125, %v590
      %v643 = vadd.f32 %v126, %v595
      %v644 = vadd.f32 %v127, %v598
      %v645 = vadd.f32 %v128, %v603
      %v646 = vadd.f32 %v129, %v606
      %v647 = vadd.f32 %v130, %v611
      %v648 = vadd.f32 %v131, %v614
      %649 = vst [vmem:[#allocation2] sm:$0xff] %v617
      %650 = vst [vmem:[#allocation2 + $0x8] sm:$0xff] %v618
      %651 = vst [vmem:[#allocation2 + $0x10] sm:$0xff] %v619
      %652 = vst [vmem:[#allocation2 + $0x18] sm:$0xff] %v620
      %653 = vst [vmem:[#allocation2 + $0x20] sm:$0xff] %v621
      %654 = vst [vmem:[#allocation2 + $0x28] sm:$0xff] %v622
      %655 = vst [vmem:[#allocation2 + $0x30] sm:$0xff] %v623
      %656 = vst [vmem:[#allocation2 + $0x38] sm:$0xff] %v624
      %657 = vst [vmem:[#allocation2 + $0x40] sm:$0xff] %v625
      %658 = vst [vmem:[#allocation2 + $0x48] sm:$0xff] %v626
      %659 = vst [vmem:[#allocation2 + $0x50] sm:$0xff] %v627
      %660 = vst [vmem:[#allocation2 + $0x58] sm:$0xff] %v628
      %661 = vst [vmem:[#allocation2 + $0x60] sm:$0xff] %v629
      %662 = vst [vmem:[#allocation2 + $0x68] sm:$0xff] %v630
      %663 = vst [vmem:[#allocation2 + $0x70] sm:$0xff] %v631
      %664 = vst [vmem:[#allocation2 + $0x78] sm:$0xff] %v632
      %665 = vst [vmem:[#allocation2 + $0x80] sm:$0xff] %v633
      %666 = vst [vmem:[#allocation2 + $0x88] sm:$0xff] %v634
      %667 = vst [vmem:[#allocation2 + $0x90] sm:$0xff] %v635
      %668 = vst [vmem:[#allocation2 + $0x98] sm:$0xff] %v636
      %669 = vst [vmem:[#allocation2 + $0xa0] sm:$0xff] %v637
      %670 = vst [vmem:[#allocation2 + $0xa8] sm:$0xff] %v638
      %671 = vst [vmem:[#allocation2 + $0xb0] sm:$0xff] %v639
      %672 = vst [vmem:[#allocation2 + $0xb8] sm:$0xff] %v640
      %673 = vst [vmem:[#allocation2 + $0xc0] sm:$0xff] %v641
      %674 = vst [vmem:[#allocation2 + $0xc8] sm:$0xff] %v642
      %675 = vst [vmem:[#allocation2 + $0xd0] sm:$0xff] %v643
      %676 = vst [vmem:[#allocation2 + $0xd8] sm:$0xff] %v644
      %677 = vst [vmem:[#allocation2 + $0xe0] sm:$0xff] %v645
      %678 = vst [vmem:[#allocation2 + $0xe8] sm:$0xff] %v646
      %679 = vst [vmem:[#allocation2 + $0xf0] sm:$0xff] %v647
      %680 = vst [vmem:[#allocation2 + $0xf8] sm:$0xff] %v648
    $region29: #{tpu_custom_call.1} parent=1 // pred_fallthru
      _
    // Predicated region
    $region30: #{tpu_custom_call.1} parent=1 // pred_check
      %p681 = pneg %p56
    $region31: #{tpu_custom_call.1} parent=1 // pred_check_branch
      %683 = sbr.rel (%p681) target = $region33
    $region32: #{tpu_custom_call.1} parent=1 // pred_region
      %v684 = vld [vmem:[#allocation2] sm:$0xff]
      %v685 = vld [vmem:[#allocation2 + $0x8] sm:$0xff]
      %v686 = vld [vmem:[#allocation2 + $0x10] sm:$0xff]
      %v687 = vld [vmem:[#allocation2 + $0x18] sm:$0xff]
      %v688 = vld [vmem:[#allocation2 + $0x20] sm:$0xff]
      %v689 = vld [vmem:[#allocation2 + $0x28] sm:$0xff]
      %v690 = vld [vmem:[#allocation2 + $0x30] sm:$0xff]
      %v691 = vld [vmem:[#allocation2 + $0x38] sm:$0xff]
      %v692 = vld [vmem:[#allocation2 + $0x40] sm:$0xff]
      %v693 = vld [vmem:[#allocation2 + $0x48] sm:$0xff]
      %v694 = vld [vmem:[#allocation2 + $0x50] sm:$0xff]
      %v695 = vld [vmem:[#allocation2 + $0x58] sm:$0xff]
      %v696 = vld [vmem:[#allocation2 + $0x60] sm:$0xff]
      %v697 = vld [vmem:[#allocation2 + $0x68] sm:$0xff]
      %v698 = vld [vmem:[#allocation2 + $0x70] sm:$0xff]
      %v699 = vld [vmem:[#allocation2 + $0x78] sm:$0xff]
      %v700 = vld [vmem:[#allocation2 + $0x80] sm:$0xff]
      %v701 = vld [vmem:[#allocation2 + $0x88] sm:$0xff]
      %v702 = vld [vmem:[#allocation2 + $0x90] sm:$0xff]
      %v703 = vld [vmem:[#allocation2 + $0x98] sm:$0xff]
      %v704 = vld [vmem:[#allocation2 + $0xa0] sm:$0xff]
      %v705 = vld [vmem:[#allocation2 + $0xa8] sm:$0xff]
      %v706 = vld [vmem:[#allocation2 + $0xb0] sm:$0xff]
      %v707 = vld [vmem:[#allocation2 + $0xb8] sm:$0xff]
      %v708 = vld [vmem:[#allocation2 + $0xc0] sm:$0xff]
      %v709 = vld [vmem:[#allocation2 + $0xc8] sm:$0xff]
      %v710 = vld [vmem:[#allocation2 + $0xd0] sm:$0xff]
      %v711 = vld [vmem:[#allocation2 + $0xd8] sm:$0xff]
      %v712 = vld [vmem:[#allocation2 + $0xe0] sm:$0xff]
      %v713 = vld [vmem:[#allocation2 + $0xe8] sm:$0xff]
      %v714 = vld [vmem:[#allocation2 + $0xf0] sm:$0xff]
      %v715 = vld [vmem:[#allocation2 + $0xf8] sm:$0xff]
      %v716 = vld [vmem:[%s4] sm:$0x1]
      %v718 = vlaneseq
      %v719 = vshrl.u32 %v718, 7
      %v720 = vsub.s32 0, %v719
      %v721 = vrot.slane %v716, %v720
      %v723 = vadd.f32 %v684, %v721
      %v724 = vadd.f32 %v685, %v721
      %v725 = vadd.f32 %v686, %v721
      %v726 = vadd.f32 %v687, %v721
      %v727 = vadd.f32 %v688, %v721
      %v728 = vadd.f32 %v689, %v721
      %v729 = vadd.f32 %v690, %v721
      %v730 = vadd.f32 %v691, %v721
      %v731 = vadd.f32 %v692, %v721
      %v732 = vadd.f32 %v693, %v721
      %v733 = vadd.f32 %v694, %v721
      %v734 = vadd.f32 %v695, %v721
      %v735 = vadd.f32 %v696, %v721
      %v736 = vadd.f32 %v697, %v721
      %v737 = vadd.f32 %v698, %v721
      %v738 = vadd.f32 %v699, %v721
      %v739 = vadd.f32 %v700, %v721
      %v740 = vadd.f32 %v701, %v721
      %v741 = vadd.f32 %v702, %v721
      %v742 = vadd.f32 %v703, %v721
      %v743 = vadd.f32 %v704, %v721
      %v744 = vadd.f32 %v705, %v721
      %v745 = vadd.f32 %v706, %v721
      %v746 = vadd.f32 %v707, %v721
      %v747 = vadd.f32 %v708, %v721
      %v748 = vadd.f32 %v709, %v721
      %v749 = vadd.f32 %v710, %v721
      %v750 = vadd.f32 %v711, %v721
      %v751 = vadd.f32 %v712, %v721
      %v752 = vadd.f32 %v713, %v721
      %v753 = vadd.f32 %v714, %v721
      %v754 = vadd.f32 %v715, %v721
      %v755 = vmax.f32 %v723, 0.0
      %v756 = vmax.f32 %v724, 0.0
      %v757 = vmax.f32 %v725, 0.0
      %v758 = vmax.f32 %v726, 0.0
      %v759 = vmax.f32 %v727, 0.0
      %v760 = vmax.f32 %v728, 0.0
      %v761 = vmax.f32 %v729, 0.0
      %v762 = vmax.f32 %v730, 0.0
      %v763 = vmax.f32 %v731, 0.0
      %v764 = vmax.f32 %v732, 0.0
      %v765 = vmax.f32 %v733, 0.0
      %v766 = vmax.f32 %v734, 0.0
      %v767 = vmax.f32 %v735, 0.0
      %v768 = vmax.f32 %v736, 0.0
      %v769 = vmax.f32 %v737, 0.0
      %v770 = vmax.f32 %v738, 0.0
      %v771 = vmax.f32 %v739, 0.0
      %v772 = vmax.f32 %v740, 0.0
      %v773 = vmax.f32 %v741, 0.0
      %v774 = vmax.f32 %v742, 0.0
      %v775 = vmax.f32 %v743, 0.0
      %v776 = vmax.f32 %v744, 0.0
      %v777 = vmax.f32 %v745, 0.0
      %v778 = vmax.f32 %v746, 0.0
      %v779 = vmax.f32 %v747, 0.0
      %v780 = vmax.f32 %v748, 0.0
      %v781 = vmax.f32 %v749, 0.0
      %v782 = vmax.f32 %v750, 0.0
      %v783 = vmax.f32 %v751, 0.0
      %v784 = vmax.f32 %v752, 0.0
      %v785 = vmax.f32 %v753, 0.0
      %v786 = vmax.f32 %v754, 0.0
      %v787 = vpack.c.bf16 %v756, %v755
      %v788 = vpack.c.bf16 %v758, %v757
      %v789 = vpack.c.bf16 %v760, %v759
      %v790 = vpack.c.bf16 %v762, %v761
      %v791 = vpack.c.bf16 %v764, %v763
      %v792 = vpack.c.bf16 %v766, %v765
      %v793 = vpack.c.bf16 %v768, %v767
      %v794 = vpack.c.bf16 %v770, %v769
      %v795 = vpack.c.bf16 %v772, %v771
      %v796 = vpack.c.bf16 %v774, %v773
      %v797 = vpack.c.bf16 %v776, %v775
      %v798 = vpack.c.bf16 %v778, %v777
      %v799 = vpack.c.bf16 %v780, %v779
      %v800 = vpack.c.bf16 %v782, %v781
      %v801 = vpack.c.bf16 %v784, %v783
      %v802 = vpack.c.bf16 %v786, %v785
      %v819 = vunpack.c.l.b16 %v787
      %v820 = vunpack.c.h.b16 %v787
      %v821 = vunpack.c.l.b16 %v788
      %v822 = vunpack.c.h.b16 %v788
      %v823 = vunpack.c.l.b16 %v789
      %v824 = vunpack.c.h.b16 %v789
      %v825 = vunpack.c.l.b16 %v790
      %v826 = vunpack.c.h.b16 %v790
      %v827 = vunpack.c.l.b16 %v791
      %v828 = vunpack.c.h.b16 %v791
      %v829 = vunpack.c.l.b16 %v792
      %v830 = vunpack.c.h.b16 %v792
      %v831 = vunpack.c.l.b16 %v793
      %v832 = vunpack.c.h.b16 %v793
      %v833 = vunpack.c.l.b16 %v794
      %v834 = vunpack.c.h.b16 %v794
      %v835 = vunpack.c.l.b16 %v795
      %v836 = vunpack.c.h.b16 %v795
      %v837 = vunpack.c.l.b16 %v796
      %v838 = vunpack.c.h.b16 %v796
      %v839 = vunpack.c.l.b16 %v797
      %v840 = vunpack.c.h.b16 %v797
      %v841 = vunpack.c.l.b16 %v798
      %v842 = vunpack.c.h.b16 %v798
      %v843 = vunpack.c.l.b16 %v799
      %v844 = vunpack.c.h.b16 %v799
      %v845 = vunpack.c.l.b16 %v800
      %v846 = vunpack.c.h.b16 %v800
      %v847 = vunpack.c.l.b16 %v801
      %v848 = vunpack.c.h.b16 %v801
      %v849 = vunpack.c.l.b16 %v802
      %v850 = vunpack.c.h.b16 %v802
      %v851 = vpack.c.b16 %v819, %v819
      %v852 = vpack.c.b16 %v820, %v820
      %v853 = vpack.c.b16 %v821, %v821
      %v854 = vpack.c.b16 %v822, %v822
      %v855 = vpack.c.b16 %v823, %v823
      %v856 = vpack.c.b16 %v824, %v824
      %v857 = vpack.c.b16 %v825, %v825
      %v858 = vpack.c.b16 %v826, %v826
      %v859 = vpack.c.b16 %v827, %v827
      %v860 = vpack.c.b16 %v828, %v828
      %v861 = vpack.c.b16 %v829, %v829
      %v862 = vpack.c.b16 %v830, %v830
      %v863 = vpack.c.b16 %v831, %v831
      %v864 = vpack.c.b16 %v832, %v832
      %v865 = vpack.c.b16 %v833, %v833
      %v866 = vpack.c.b16 %v834, %v834
      %v867 = vpack.c.b16 %v835, %v835
      %v868 = vpack.c.b16 %v836, %v836
      %v869 = vpack.c.b16 %v837, %v837
      %v870 = vpack.c.b16 %v838, %v838
      %v871 = vpack.c.b16 %v839, %v839
      %v872 = vpack.c.b16 %v840, %v840
      %v873 = vpack.c.b16 %v841, %v841
      %v874 = vpack.c.b16 %v842, %v842
      %v875 = vpack.c.b16 %v843, %v843
      %v876 = vpack.c.b16 %v844, %v844
      %v877 = vpack.c.b16 %v845, %v845
      %v878 = vpack.c.b16 %v846, %v846
      %v879 = vpack.c.b16 %v847, %v847
      %v880 = vpack.c.b16 %v848, %v848
      %v881 = vpack.c.b16 %v849, %v849
      %v882 = vpack.c.b16 %v850, %v850
      %915 = vst [vmem:[#allocation11] sm:$0xf] %v851
      %916 = vst [vmem:[#allocation11 + $0x4] sm:$0xf] %v852
      %917 = vst [vmem:[#allocation11 + $0x8] sm:$0xf] %v853
      %918 = vst [vmem:[#allocation11 + $0xc] sm:$0xf] %v854
      %919 = vst [vmem:[#allocation11 + $0x10] sm:$0xf] %v855
      %920 = vst [vmem:[#allocation11 + $0x14] sm:$0xf] %v856
      %921 = vst [vmem:[#allocation11 + $0x18] sm:$0xf] %v857
      %922 = vst [vmem:[#allocation11 + $0x1c] sm:$0xf] %v858
      %923 = vst [vmem:[#allocation11 + $0x20] sm:$0xf] %v859
      %924 = vst [vmem:[#allocation11 + $0x24] sm:$0xf] %v860
      %925 = vst [vmem:[#allocation11 + $0x28] sm:$0xf] %v861
      %926 = vst [vmem:[#allocation11 + $0x2c] sm:$0xf] %v862
      %927 = vst [vmem:[#allocation11 + $0x30] sm:$0xf] %v863
      %928 = vst [vmem:[#allocation11 + $0x34] sm:$0xf] %v864
      %929 = vst [vmem:[#allocation11 + $0x38] sm:$0xf] %v865
      %930 = vst [vmem:[#allocation11 + $0x3c] sm:$0xf] %v866
      %931 = vst [vmem:[#allocation11 + $0x40] sm:$0xf] %v867
      %932 = vst [vmem:[#allocation11 + $0x44] sm:$0xf] %v868
      %933 = vst [vmem:[#allocation11 + $0x48] sm:$0xf] %v869
      %934 = vst [vmem:[#allocation11 + $0x4c] sm:$0xf] %v870
      %935 = vst [vmem:[#allocation11 + $0x50] sm:$0xf] %v871
      %936 = vst [vmem:[#allocation11 + $0x54] sm:$0xf] %v872
      %937 = vst [vmem:[#allocation11 + $0x58] sm:$0xf] %v873
      %938 = vst [vmem:[#allocation11 + $0x5c] sm:$0xf] %v874
      %939 = vst [vmem:[#allocation11 + $0x60] sm:$0xf] %v875
      %940 = vst [vmem:[#allocation11 + $0x64] sm:$0xf] %v876
      %941 = vst [vmem:[#allocation11 + $0x68] sm:$0xf] %v877
      %942 = vst [vmem:[#allocation11 + $0x6c] sm:$0xf] %v878
      %943 = vst [vmem:[#allocation11 + $0x70] sm:$0xf] %v879
      %944 = vst [vmem:[#allocation11 + $0x74] sm:$0xf] %v880
      %945 = vst [vmem:[#allocation11 + $0x78] sm:$0xf] %v881
      %946 = vst [vmem:[#allocation11 + $0x7c] sm:$0xf] %v882
    $region33: #{tpu_custom_call.1} parent=1 // pred_fallthru
      _
    // Predicated region
    $region34: #{tpu_custom_call.1} parent=1 // pred_check
      _
    $region35: #{tpu_custom_call.1} parent=1 // pred_check_branch
      %948 = sbr.rel (0) target = $region37
    $region36: #{tpu_custom_call.1} parent=1 // pred_region
      %s950 = ssub.s32 2048, 2048
      %951 = vsyncadd [#allocation8], %s950
      %s952 = sshll.u32 [#allocation11], 4
      %s953 = int_to_ptr.vmem [resolvable:$true] %s952
      %958 = dma.vmem_to_hbm [thread:$0]  %s953, 2048, %s5, [#allocation8], 64, 64, 4
    $region37: #{tpu_custom_call.1} parent=1 // pred_fallthru
      _
    // Predicated region
    $region38: #{tpu_custom_call.1} parent=1 // pred_check
      _
    $region39: #{tpu_custom_call.1} parent=1 // pred_check_branch
      %960 = sbr.rel (0) target = $region41
    $region40: #{tpu_custom_call.1} parent=1 // pred_region
      %961 = dma.done [#allocation8], 2048
    $region41: #{tpu_custom_call.1} parent=1 // pred_fallthru
      _
    %962 = vsyncpa [#allocation7], 1
    %963 = vsyncpa [#allocation10], 1
    %964 = vsyncpa [#allocation8], 1

</llo_original>
